<compile_context>
chip_gen: v7x
topology: tpu7x:2x2x1
jax: 0.10.0
libtpu: 0.0.40
codegen_flags: <defaults>
</compile_context>

<pallas_src>
import functools

import jax
import jax.numpy as jnp
from jax.experimental import pallas as pl
from jax.experimental.pallas import tpu as pltpu

_NEG_PAD = -1e30   # padding for the lane-major pred row  (kills padded columns)
_POS_PAD = 1e30    # padding for the sublane-side pred copy (kills padded rows)


def _srcc_plcc_kernel(scores_ref, pred_sub_ref, eps_ref, out_ref, *,
                      w_plcc: float, w_srcc: float, n: int, tile_i: int):
    t = pl.program_id(0)
    pred_row = scores_ref[0:1, :]                      # (1, N_lane), pad = -BIG
    n_lane = pred_row.shape[1]
    eps = eps_ref[0]                                   # learnable scalar (SMEM)

    # ---- PLCC term: computed once; initializes the resident accumulator -------
    @pl.when(t == 0)
    def _init():
        tgt_row = scores_ref[1:2, :]                   # (1, N_lane)
        lane = jax.lax.broadcasted_iota(jnp.int32, (1, n_lane), 1)
        valid = lane < n
        if n > 1:
            inv_n = 1.0 / float(n)
            pv = jnp.where(valid, pred_row, 0.0)
            tv = jnp.where(valid, tgt_row, 0.0)
            mean_p = jnp.sum(pv, keepdims=True) * inv_n          # (1, 1)
            mean_t = jnp.sum(tv, keepdims=True) * inv_n
            vx = jnp.where(valid, pred_row - mean_p, 0.0)
            vy = jnp.where(valid, tgt_row - mean_t, 0.0)
            sxy = jnp.sum(vx * vy, keepdims=True)
            nx = jnp.maximum(jnp.sqrt(jnp.sum(vx * vx, keepdims=True)), 1e-12)
            ny = jnp.maximum(jnp.sqrt(jnp.sum(vy * vy, keepdims=True)), 1e-12)
            # single scalar reciprocal instead of two element-wise divisions
            plcc = (1.0 - sxy * pl.reciprocal(nx * ny, approx=False)) * 0.5
        else:
            # plcc_loss falls back to (mean) L1 when batch_size == 1
            plcc = jnp.sum(jnp.where(valid, jnp.abs(pred_row - tgt_row), 0.0),
                           keepdims=True) * (1.0 / float(n))
        out_ref[...] = w_plcc * plcc

    # ---- List-monotonic (SRCC surrogate) term: one row tile per grid step ------
    # Fold eps into the cheap (TILE_I, 1) column: saves a full-size subtract.
    col_pe = pred_sub_ref[:, 0:1] + eps                # (TILE_I, 1), pad -> +BIG
    diff = pred_row - col_pe                           # (TILE_I, N_lane) broadcast
    # Strict upper triangle (j > i) as one broadcast compare:
    #   (1, N_lane) lane index  vs  (TILE_I, 1) global row index.
    lane_j = jax.lax.broadcasted_iota(jnp.int32, (1, n_lane), 1)
    row_i = jax.lax.broadcasted_iota(jnp.int32, (tile_i, 1), 0) + t * tile_i
    mask = lane_j > row_i                              # -> (TILE_I, N_lane)
    # +/-BIG padding makes relu() zero every out-of-range pair.
    mono_t = jnp.sum(jnp.where(mask, jnp.maximum(diff, 0.0), 0.0),
                     keepdims=True)                    # (1, 1)
    out_ref[...] = out_ref[...] + w_srcc * mono_t


def list_monotonic_srcc_loss(pred, target, eps_param,
                             loss_weight_plcc=1.0, loss_weight_srcc=1.0,
                             tile_rows=None):
    """pred, target: (N,) quality scores (sorted by descending GT quality).
    eps_param: the (1, 1) learnable `_eps` parameter of ListMonotonicLoss."""
    # TODO(synk): for production (many small batches), amortize the fixed launch/DMA
    # cost by batching several loss evaluations in one pallas_call (grid over batch).
    pred = jnp.asarray(pred, jnp.float32).reshape(-1)
    target = jnp.asarray(target, jnp.float32).reshape(-1)
    n = int(pred.shape[0])

    n_lane = max(128, ((n + 127) // 128) * 128)
    # Row-tile size: multiple of 8, capped so each (TILE_I, N_lane) f32 slab stays
    # around <= 2 MiB (comfortable under the 64 MiB v7x VMEM / default scoped
    # limits even with double buffering and a few live temporaries).
    budget_rows = max(8, ((2 * 1024 * 1024) // (4 * n_lane)) // 8 * 8)
    n_round8 = ((n + 7) // 8) * 8
    if tile_rows is None:
        tile_i = min(512, n_round8, budget_rows)
    else:
        tile_i = min(((int(tile_rows) + 7) // 8) * 8, n_round8)
    tile_i = max(8, tile_i)
    num_tiles = -(-n // tile_i)
    n_row = num_tiles * tile_i

    # Lane-major packed scores (resident across the whole grid).  pred padded with
    # -BIG so padded columns never survive relu; PLCC is explicitly lane-masked.
    pred_lane = jnp.full((n_lane,), _NEG_PAD, jnp.float32).at[:n].set(pred)
    tgt_lane = jnp.zeros((n_lane,), jnp.float32).at[:n].set(target)
    scores = jnp.stack([pred_lane, tgt_lane], axis=0)            # (2, n_lane)

    # Sublane-side copy of pred: dense in HBM, +BIG on padded rows, 8 replicated
    # lanes so each per-tile DMA reads one contiguous chunk.
    pred_sub = jnp.full((n_row,), _POS_PAD, jnp.float32).at[:n].set(pred)
    pred_sub = jnp.broadcast_to(pred_sub[:, None], (n_row, 8))   # (n_row, 8)

    eps1 = jnp.asarray(eps_param, jnp.float32).reshape(1)

    kernel = functools.partial(_srcc_plcc_kernel,
                               w_plcc=float(loss_weight_plcc),
                               w_srcc=float(loss_weight_srcc),
                               n=n, tile_i=tile_i)

    out = pl.pallas_call(
        kernel,
        out_shape=jax.ShapeDtypeStruct((1, 1), jnp.float32),
        grid=(num_tiles,),
        in_specs=[
            pl.BlockSpec((2, n_lane), lambda t: (0, 0)),     # packed scores, resident
            pl.BlockSpec((tile_i, 8), lambda t: (t, 0)),     # per-tile sublane pred
            pl.BlockSpec((1,), lambda t: (0,),
                         memory_space=pltpu.SMEM),           # eps parameter
        ],
        out_specs=pl.BlockSpec((1, 1), lambda t: (0, 0)),    # resident scalar accumulator
        compiler_params=pltpu.CompilerParams(
            dimension_semantics=("arbitrary",),              # grid axis carries accumulator
            vmem_limit_bytes=32 * 1024 * 1024),
    )(scores, pred_sub, eps1)
    return out[0, 0]


def _reference(pred, target, eps_param, w_plcc=1.0, w_srcc=1.0):
    """Pure-JAX reference mirroring the PyTorch module."""
    n = pred.shape[0]
    if n > 1:
        vx = pred - jnp.mean(pred)
        vy = target - jnp.mean(target)
        nx = jnp.maximum(jnp.linalg.norm(vx), 1e-12)
        ny = jnp.maximum(jnp.linalg.norm(vy), 1e-12)
        plcc = (1.0 - jnp.sum((vx / nx) * (vy / ny))) / 2.0
    else:
        plcc = jnp.mean(jnp.abs(pred - target))
    diff = pred[None, :] - pred[:, None] - eps_param.reshape(())
    mask = jnp.triu(jnp.ones((n, n), bool), k=1)
    mono = jnp.sum(jnp.where(mask, jnp.maximum(diff, 0.0), 0.0))
    return w_plcc * plcc + w_srcc * mono


def _run_case(n, key, w_plcc, w_srcc, tile_rows=None):
    kp, kt, ke = jax.random.split(key, 3)
    pred = jax.random.normal(kp, (n,), dtype=jnp.float32)
    target = jax.random.normal(kt, (n,), dtype=jnp.float32)
    # ListMonotonicLoss._eps = nn.Parameter(torch.randn([1, 1]))
    eps_param = jax.random.normal(ke, (1, 1), dtype=jnp.float32)

    loss = list_monotonic_srcc_loss(pred, target, eps_param,
                                    loss_weight_plcc=w_plcc,
                                    loss_weight_srcc=w_srcc,
                                    tile_rows=tile_rows)
    loss = jax.block_until_ready(loss)
    ref = _reference(pred, target, eps_param, w_plcc, w_srcc)
    assert jnp.allclose(loss, ref, rtol=1e-4, atol=1e-5), (n, loss, ref)


if __name__ == "__main__":
    root = jax.random.PRNGKey(0)
    k1, k2, k3, k4 = jax.random.split(root, 4)
    _run_case(8, k1, 1.0, 1.0)                  # single tile (typical IQA batch)
    _run_case(40, k2, 0.7, 1.3, tile_rows=16)   # 3 row tiles -> accumulator + padding
    _run_case(1, k3, 1.0, 1.0)                  # batch==1 L1 fallback branch
    _run_case(600, k4, 1.0, 1.0)                # default tiling, multi-tile (512+88)
    print("KERNEL_OK")
</pallas_src>

<mosaic_0001>
module attributes {stable_mosaic.version = 11 : i64} {
  func.func @_srcc_plcc_kernel(%arg0: i32, %arg1: memref<2x128xf32, #tpu.memory_space<vmem>>, %arg2: memref<8x8xf32, #tpu.memory_space<vmem>>, %arg3: memref<1xf32, #tpu.memory_space<smem>>, %arg4: memref<1x1xf32, #tpu.memory_space<vmem>>) attributes {dimension_semantics = [#tpu.dimension_semantics<arbitrary>], iteration_bounds = array<i64: 1>, scalar_prefetch = 0 : i64, scratch_operands = 0 : i64, tpu.core_type = #tpu.core_type<tc>, window_params = [{pipeline_mode = #tpu.pipeline_mode<synchronous>, transform_indices = @transform_0, window_bounds = array<i64: 2, 128>}, {transform_indices = @transform_1, window_bounds = array<i64: 8, 8>}, {transform_indices = @transform_2, window_bounds = array<i64: 1>}, {pipeline_mode = #tpu.pipeline_mode<synchronous>, transform_indices = @transform_3, window_bounds = array<i64: 1, 1>}]} {
    %c0 = arith.constant 0 : index
    %c0_0 = arith.constant 0 : index
    %0 = vector.load %arg1[%c0, %c0_0] : memref<2x128xf32, #tpu.memory_space<vmem>>, vector<1x128xf32>
    %c0_1 = arith.constant 0 : index
    %1 = memref.load %arg3[%c0_1] : memref<1xf32, #tpu.memory_space<smem>>
    %c0_i32 = arith.constant 0 : i32
    %2 = arith.cmpi eq, %arg0, %c0_i32 : i32
    %3 = arith.extui %2 : i1 to i32
    %c0_i32_2 = arith.constant 0 : i32
    %4 = arith.cmpi ne, %3, %c0_i32_2 : i32
    scf.if %4 {
      %c1 = arith.constant 1 : index
      %c0_12 = arith.constant 0 : index
      %33 = vector.load %arg1[%c1, %c0_12] : memref<2x128xf32, #tpu.memory_space<vmem>>, vector<1x128xf32>
      %34 = tpu.iota {dimensions = array<i32: 1>} : vector<1x128xi32>
      %c8_i32_13 = arith.constant 8 : i32
      %35 = vector.broadcast %c8_i32_13 : i32 to vector<1x128xi32>
      %36 = arith.cmpi slt, %34, %35 : vector<1x128xi32>
      %cst_14 = arith.constant 0.000000e+00 : f32
      %37 = vector.broadcast %cst_14 : f32 to vector<1x128xf32>
      %38 = arith.select %36, %0, %37 : vector<1x128xi1>, vector<1x128xf32>
      %cst_15 = arith.constant 0.000000e+00 : f32
      %39 = vector.broadcast %cst_15 : f32 to vector<1x128xf32>
      %40 = arith.select %36, %33, %39 : vector<1x128xi1>, vector<1x128xf32>
      %41 = vector.shape_cast %38 : vector<1x128xf32> to vector<1x1x128xf32>
      %cst_16 = arith.constant dense<0.000000e+00> : vector<1xf32>
      %42 = vector.multi_reduction <add>, %41, %cst_16 [1, 2] : vector<1x1x128xf32> to vector<1xf32>
      %43 = vector.shape_cast %42 : vector<1xf32> to vector<1x1x1xf32>
      %44 = vector.extract %43[0, 0, 0] : f32 from vector<1x1x1xf32>
      %45 = vector.broadcast %44 : f32 to vector<1x1xf32>
      %cst_17 = arith.constant 1.250000e-01 : f32
      %46 = vector.broadcast %cst_17 : f32 to vector<1x1xf32>
      %47 = arith.mulf %45, %46 : vector<1x1xf32>
      %48 = vector.shape_cast %40 : vector<1x128xf32> to vector<1x1x128xf32>
      %cst_18 = arith.constant dense<0.000000e+00> : vector<1xf32>
      %49 = vector.multi_reduction <add>, %48, %cst_18 [1, 2] : vector<1x1x128xf32> to vector<1xf32>
      %50 = vector.shape_cast %49 : vector<1xf32> to vector<1x1x1xf32>
      %51 = vector.extract %50[0, 0, 0] : f32 from vector<1x1x1xf32>
      %52 = vector.broadcast %51 : f32 to vector<1x1xf32>
      %cst_19 = arith.constant 1.250000e-01 : f32
      %53 = vector.broadcast %cst_19 : f32 to vector<1x1xf32>
      %54 = arith.mulf %52, %53 : vector<1x1xf32>
      %55 = vector.broadcast %47 : vector<1x1xf32> to vector<1x128xf32>
      %56 = arith.subf %0, %55 : vector<1x128xf32>
      %cst_20 = arith.constant 0.000000e+00 : f32
      %57 = vector.broadcast %cst_20 : f32 to vector<1x128xf32>
      %58 = arith.select %36, %56, %57 : vector<1x128xi1>, vector<1x128xf32>
      %59 = vector.broadcast %54 : vector<1x1xf32> to vector<1x128xf32>
      %60 = arith.subf %33, %59 : vector<1x128xf32>
      %cst_21 = arith.constant 0.000000e+00 : f32
      %61 = vector.broadcast %cst_21 : f32 to vector<1x128xf32>
      %62 = arith.select %36, %60, %61 : vector<1x128xi1>, vector<1x128xf32>
      %63 = arith.mulf %58, %62 : vector<1x128xf32>
      %64 = vector.shape_cast %63 : vector<1x128xf32> to vector<1x1x128xf32>
      %cst_22 = arith.constant dense<0.000000e+00> : vector<1xf32>
      %65 = vector.multi_reduction <add>, %64, %cst_22 [1, 2] : vector<1x1x128xf32> to vector<1xf32>
      %66 = vector.shape_cast %65 : vector<1xf32> to vector<1x1x1xf32>
      %67 = vector.extract %66[0, 0, 0] : f32 from vector<1x1x1xf32>
      %68 = vector.broadcast %67 : f32 to vector<1x1xf32>
      %69 = arith.mulf %58, %58 : vector<1x128xf32>
      %70 = vector.shape_cast %69 : vector<1x128xf32> to vector<1x1x128xf32>
      %cst_23 = arith.constant dense<0.000000e+00> : vector<1xf32>
      %71 = vector.multi_reduction <add>, %70, %cst_23 [1, 2] : vector<1x1x128xf32> to vector<1xf32>
      %72 = vector.shape_cast %71 : vector<1xf32> to vector<1x1x1xf32>
      %73 = vector.extract %72[0, 0, 0] : f32 from vector<1x1x1xf32>
      %74 = vector.broadcast %73 : f32 to vector<1x1xf32>
      %75 = math.sqrt %74 : vector<1x1xf32>
      %cst_24 = arith.constant 9.99999996E-13 : f32
      %76 = vector.broadcast %cst_24 : f32 to vector<1x1xf32>
      %77 = arith.maximumf %75, %76 : vector<1x1xf32>
      %78 = arith.mulf %62, %62 : vector<1x128xf32>
      %79 = vector.shape_cast %78 : vector<1x128xf32> to vector<1x1x128xf32>
      %cst_25 = arith.constant dense<0.000000e+00> : vector<1xf32>
      %80 = vector.multi_reduction <add>, %79, %cst_25 [1, 2] : vector<1x1x128xf32> to vector<1xf32>
      %81 = vector.shape_cast %80 : vector<1xf32> to vector<1x1x1xf32>
      %82 = vector.extract %81[0, 0, 0] : f32 from vector<1x1x1xf32>
      %83 = vector.broadcast %82 : f32 to vector<1x1xf32>
      %84 = math.sqrt %83 : vector<1x1xf32>
      %cst_26 = arith.constant 9.99999996E-13 : f32
      %85 = vector.broadcast %cst_26 : f32 to vector<1x1xf32>
      %86 = arith.maximumf %84, %85 : vector<1x1xf32>
      %87 = arith.mulf %77, %86 : vector<1x1xf32>
      %88 = tpu.reciprocal %87 : vector<1x1xf32> -> vector<1x1xf32>
      %89 = arith.mulf %68, %88 : vector<1x1xf32>
      %cst_27 = arith.constant 1.000000e+00 : f32
      %90 = vector.broadcast %cst_27 : f32 to vector<1x1xf32>
      %91 = arith.subf %90, %89 : vector<1x1xf32>
      %cst_28 = arith.constant 5.000000e-01 : f32
      %92 = vector.broadcast %cst_28 : f32 to vector<1x1xf32>
      %93 = arith.mulf %91, %92 : vector<1x1xf32>
      %cst_29 = arith.constant 1.000000e+00 : f32
      %94 = vector.broadcast %cst_29 : f32 to vector<1x1xf32>
      %95 = arith.mulf %94, %93 : vector<1x1xf32>
      %c0_30 = arith.constant 0 : index
      %c0_31 = arith.constant 0 : index
      %96 = vector.load %arg4[%c0_30, %c0_31] : memref<1x1xf32, #tpu.memory_space<vmem>>, vector<1x1xf32>
      tpu.vector_store %arg4[%c0_30, %c0_31], %95 {strides = array<i32>} : memref<1x1xf32, #tpu.memory_space<vmem>>, vector<1x1xf32>,
    } else {
    }
    %c0_3 = arith.constant 0 : index
    %c0_4 = arith.constant 0 : index
    %5 = vector.load %arg2[%c0_3, %c0_4] : memref<8x8xf32, #tpu.memory_space<vmem>>, vector<8x1xf32>
    %6 = vector.broadcast %1 : f32 to vector<8x1xf32>
    %7 = arith.addf %5, %6 : vector<8x1xf32>
    %8 = vector.broadcast %0 : vector<1x128xf32> to vector<8x128xf32>
    %9 = vector.broadcast %7 : vector<8x1xf32> to vector<8x128xf32>
    %10 = arith.subf %8, %9 : vector<8x128xf32>
    %11 = tpu.iota {dimensions = array<i32: 1>} : vector<1x128xi32>
    %12 = tpu.iota {dimensions = array<i32: 0>} : vector<8x1xi32>
    %c8_i32 = arith.constant 8 : i32
    %13 = arith.muli %arg0, %c8_i32 : i32
    %14 = vector.broadcast %13 : i32 to vector<8x1xi32>
    %15 = arith.addi %12, %14 : vector<8x1xi32>
    %16 = vector.broadcast %11 : vector<1x128xi32> to vector<8x128xi32>
    %17 = vector.broadcast %15 : vector<8x1xi32> to vector<8x128xi32>
    %18 = arith.cmpi sgt, %16, %17 : vector<8x128xi32>
    %cst = arith.constant 0.000000e+00 : f32
    %19 = vector.broadcast %cst : f32 to vector<8x128xf32>
    %20 = arith.maximumf %10, %19 : vector<8x128xf32>
    %cst_5 = arith.constant 0.000000e+00 : f32
    %21 = vector.broadcast %cst_5 : f32 to vector<8x128xf32>
    %22 = arith.select %18, %20, %21 : vector<8x128xi1>, vector<8x128xf32>
    %23 = vector.shape_cast %22 : vector<8x128xf32> to vector<1x8x128xf32>
    %cst_6 = arith.constant dense<0.000000e+00> : vector<1xf32>
    %24 = vector.multi_reduction <add>, %23, %cst_6 [1, 2] : vector<1x8x128xf32> to vector<1xf32>
    %25 = vector.shape_cast %24 : vector<1xf32> to vector<1x1x1xf32>
    %26 = vector.extract %25[0, 0, 0] : f32 from vector<1x1x1xf32>
    %27 = vector.broadcast %26 : f32 to vector<1x1xf32>
    %c0_7 = arith.constant 0 : index
    %c0_8 = arith.constant 0 : index
    %28 = vector.load %arg4[%c0_7, %c0_8] : memref<1x1xf32, #tpu.memory_space<vmem>>, vector<1x1xf32>
    %cst_9 = arith.constant 1.000000e+00 : f32
    %29 = vector.broadcast %cst_9 : f32 to vector<1x1xf32>
    %30 = arith.mulf %29, %27 : vector<1x1xf32>
    %31 = arith.addf %28, %30 : vector<1x1xf32>
    %c0_10 = arith.constant 0 : index
    %c0_11 = arith.constant 0 : index
    %32 = vector.load %arg4[%c0_10, %c0_11] : memref<1x1xf32, #tpu.memory_space<vmem>>, vector<1x1xf32>
    tpu.vector_store %arg4[%c0_10, %c0_11], %31 {strides = array<i32>} : memref<1x1xf32, #tpu.memory_space<vmem>>, vector<1x1xf32>,
    return
  }
  func.func @transform_0(%arg0: i32) -> (i32, i32) {
    %c0_i32 = arith.constant 0 : i32
    %c0_i32_0 = arith.constant 0 : i32
    %c0_i32_1 = arith.constant 0 : i32
    return %c0_i32, %c0_i32_0 : i32, i32
  }
  func.func @transform_1(%arg0: i32) -> (i32, i32) {
    %c0_i32 = arith.constant 0 : i32
    %c0_i32_0 = arith.constant 0 : i32
    return %arg0, %c0_i32 : i32, i32
  }
  func.func @transform_2(%arg0: i32) -> i32 {
    %c0_i32 = arith.constant 0 : i32
    %c0_i32_0 = arith.constant 0 : i32
    return %c0_i32 : i32
  }
  func.func @transform_3(%arg0: i32) -> (i32, i32) {
    %c0_i32 = arith.constant 0 : i32
    %c0_i32_0 = arith.constant 0 : i32
    %c0_i32_1 = arith.constant 0 : i32
    return %c0_i32, %c0_i32_0 : i32, i32
  }
}

</mosaic_0001>

<llo_original>
// kernel: tpu_custom_call.1
$region0: #{tpu_custom_call.1}
  #allocation0 [shape = 'u32[]', space=smem, size = 0x4, offset = 0x4, fixed_abs, tag = 'smem constant byte address 0x4 - core index']
  #allocation1 [shape = 'u32[144,128]{1,0:T(1,128)}', space=vmem, size = 0x12000, scoped, tag = 'internal scratch']
  #allocation2 [shape = 'f32[1]{0:T(128)S(6)}', space=smem, size = 0x200, scoped, tag = 'scoped memory for tpu_custom_call.1']
  %s0 = inlined_call_operand.vmem [shape: f32[2,128], index: 0, kind: input, shape index: {}]
  %s1 = inlined_call_operand.hbm [shape: f32[8,8], index: 1, kind: input, shape index: {}]
  %s2 = inlined_call_operand.<no memory space> [shape: f32[1], index: 2, kind: input, shape index: {}]
  %s3 = inlined_call_operand.hbm [shape: f32[1,1], index: 3, kind: output, shape index: {}]
  %s4 = sld [smem:[#allocation0]]
  $region30: #{tpu_custom_call.1} parent=0
    _
  %s6 = ssub.s32 1, %s4
  %s7 = scalar_select 0, %s6, %s4
  %8 = sst [smem:[#allocation2]] %s2
  $region1: #{tpu_custom_call.1} parent=0
    #allocation3 [shape = 'u8[4096]{0}', space=vmem, size = 0x1000, scoped, tag = 'input window, operand 1, single buffered']
    #allocation4 [shape = 's32[1]{0}', space=sflag, size = 0x4, scoped, tag = 'scoped memory for tpu_custom_call.1']
    #allocation5 [shape = 's32[1]{0}', space=sflag, size = 0x4, scoped, tag = 'scoped memory for tpu_custom_call.1']
    #allocation6 [shape = 'u8[512]{0}', space=vmem, size = 0x400, scoped, tag = 'output window, operand 0, single buffered']
    %9 = vsyncpa [#allocation4], 0
    %10 = vsyncpa [#allocation5], 0
    // Predicated region
    $region2: #{tpu_custom_call.1} parent=1 // pred_check
      _
    $region3: #{tpu_custom_call.1} parent=1 // pred_check_branch
      %12 = sbr.rel (0) target = $region5
    $region4: #{tpu_custom_call.1} parent=1 // pred_region
      _
    $region5: #{tpu_custom_call.1} parent=1 // pred_fallthru
      _
    // Predicated region
    $region6: #{tpu_custom_call.1} parent=1 // pred_check
      _
    $region7: #{tpu_custom_call.1} parent=1 // pred_check_branch
      %14 = sbr.rel (0) target = $region9
    $region8: #{tpu_custom_call.1} parent=1 // pred_region
      %s16 = ssub.s32 128, 128
      %17 = vsyncadd [#allocation4], %s16
      %s19 = sshll.u32 [#allocation3], 4
      %s20 = int_to_ptr.vmem [resolvable:$true] %s19
      %22 = dma.hbm_to_vmem [thread:$0]  %s1, 128, %s20, [#allocation4]
    $region9: #{tpu_custom_call.1} parent=1 // pred_fallthru
      _
    // Predicated region
    $region10: #{tpu_custom_call.1} parent=1 // pred_check
      _
    $region11: #{tpu_custom_call.1} parent=1 // pred_check_branch
      %24 = sbr.rel (0) target = $region13
    $region12: #{tpu_custom_call.1} parent=1 // pred_region
      _
    $region13: #{tpu_custom_call.1} parent=1 // pred_fallthru
      _
    // Predicated region
    $region14: #{tpu_custom_call.1} parent=1 // pred_check
      _
    $region15: #{tpu_custom_call.1} parent=1 // pred_check_branch
      %26 = sbr.rel (0) target = $region17
    $region16: #{tpu_custom_call.1} parent=1 // pred_region
      %27 = dma.done [#allocation4], 128
    $region17: #{tpu_custom_call.1} parent=1 // pred_fallthru
      _
    %v28 = vld [vmem:[%s0] sm:$0x1]
    %s29 = sld [smem:[#allocation2]]
    %p30 = scmp.eq.s32.totalorder 0, 0
    // Predicated region
    $region18: #{tpu_custom_call.1} parent=1 // pred_check
      %p31 = pneg %p30
    $region19: #{tpu_custom_call.1} parent=1 // pred_check_branch
      %33 = sbr.rel (%p31) target = $region21
    $region20: #{tpu_custom_call.1} parent=1 // pred_region
      %v34 = vld [vmem:[%s0 + $0x1] sm:$0x1]
      %v35 = vlaneseq
      %v36 = vand.u32 %v35, 127
      %vm37 = vcmp.lt.s32.totalorder %v36, 8
      %v38 = vsel %vm37, %v28, 0.0
      %v39 = vsel %vm37, %v34, 0.0
      %vm40 = vcmask 1040384
      %v41 = vsel %vm40, %v38, 0.0
      %42 = vadd.xlane.f32.xlu0 %v41
      %v43 = vpop.xlane.xlu0 %42
      %v44 = vrot.slane %v43, 4
      %v45 = vadd.f32 %v43, %v44
      %v46 = vrot.slane %v45, 2
      %v47 = vadd.f32 %v45, %v46
      %v48 = vrot.slane %v47, 1
      %v49 = vadd.f32 %v47, %v48
      %s50 = vtos %v49
      %v51 = vstv %s50
      %v52 = vmul.f32 %v51, 0.125
      %v53 = vsel %vm40, %v39, 0.0
      %54 = vadd.xlane.f32.xlu0 %v53
      %v55 = vpop.xlane.xlu0 %54
      %v56 = vrot.slane %v55, 4
      %v57 = vadd.f32 %v55, %v56
      %v58 = vrot.slane %v57, 2
      %v59 = vadd.f32 %v57, %v58
      %v60 = vrot.slane %v59, 1
      %v61 = vadd.f32 %v59, %v60
      %s62 = vtos %v61
      %v63 = vstv %s62
      %v64 = vmul.f32 %v63, 0.125
      %v65 = vsub.f32 %v28, %v52
      %v66 = vsel %vm37, %v65, 0.0
      %v67 = vsub.f32 %v34, %v64
      %v68 = vsel %vm37, %v67, 0.0
      %v69 = vmul.f32 %v66, %v68
      %v70 = vsel %vm40, %v69, 0.0
      %71 = vadd.xlane.f32.xlu0 %v70
      %v72 = vpop.xlane.xlu0 %71
      %v73 = vrot.slane %v72, 4
      %v74 = vadd.f32 %v72, %v73
      %v75 = vrot.slane %v74, 2
      %v76 = vadd.f32 %v74, %v75
      %v77 = vrot.slane %v76, 1
      %v78 = vadd.f32 %v76, %v77
      %s79 = vtos %v78
      %v80 = vstv %s79
      %v81 = vmul.f32 %v66, %v66
      %v82 = vsel %vm40, %v81, 0.0
      %83 = vadd.xlane.f32.xlu0 %v82
      %v84 = vpop.xlane.xlu0 %83
      %v85 = vrot.slane %v84, 4
      %v86 = vadd.f32 %v84, %v85
      %v87 = vrot.slane %v86, 2
      %v88 = vadd.f32 %v86, %v87
      %v89 = vrot.slane %v88, 1
      %v90 = vadd.f32 %v88, %v89
      %s91 = vtos %v90
      %v92 = vstv %s91
      %v93 = vrsqrt.pop %v92
      %v94 = vmul.f32 %v92, %v93
      %vm95 = vcmp.eq.f32.partialorder %v92, inf
      %v96 = vsel %vm95, %v92, %v94
      %vm97 = vcmp.eq.f32.partialorder %v92, 0.0
      %v98 = vand.u32 %v92, 2147483648
      %v99 = vsel %vm97, %v98, %v96
      %v100 = vmax.f32 %v99, 1e-12
      %v101 = vmul.f32 %v68, %v68
      %v102 = vsel %vm40, %v101, 0.0
      %103 = vadd.xlane.f32.xlu0 %v102
      %v104 = vpop.xlane.xlu0 %103
      %v105 = vrot.slane %v104, 4
      %v106 = vadd.f32 %v104, %v105
      %v107 = vrot.slane %v106, 2
      %v108 = vadd.f32 %v106, %v107
      %v109 = vrot.slane %v108, 1
      %v110 = vadd.f32 %v108, %v109
      %s111 = vtos %v110
      %v112 = vstv %s111
      %v113 = vrsqrt.pop %v112
      %v114 = vmul.f32 %v112, %v113
      %vm115 = vcmp.eq.f32.partialorder %v112, inf
      %v116 = vsel %vm115, %v112, %v114
      %vm117 = vcmp.eq.f32.partialorder %v112, 0.0
      %v118 = vand.u32 %v112, 2147483648
      %v119 = vsel %vm117, %v118, %v116
      %v120 = vmax.f32 %v119, 1e-12
      %v121 = vmul.f32 %v100, %v120
      %v122 = vrcp.pop %v121
      %v123 = vmul.f32 %v80, %v122
      %v124 = vsub.f32 1.0, %v123
      %v125 = vmul.f32 %v124, 0.5
      %vm126 = vcmask 0
      %127 = vst.msk [vmem:[#allocation6] sm:$0x1] %vm126, %v125
    $region21: #{tpu_custom_call.1} parent=1 // pred_fallthru
      _
    %v128 = vld [vmem:[#allocation3] sm:$0xff]
    %v129 = vstv %s29
    %v130 = vadd.f32 %v128, %v129
    %v131 = vlaneseq
    %v132 = vshrl.u32 %v131, 7
    %v133 = vsub.s32 0, %v132
    %v134 = vrot.slane %v28, %v133
    %136 = vset.pattern.permute.xlu0 0
    %137 = vperm.xlu0 %136, %v130
    %v138 = vpop.permute.xlu0 %137
    %v140 = vsub.f32 %v134, %v138
    %v141 = vlaneseq
    %v142 = vand.u32 %v141, 127
    %v143 = vlaneseq
    %v144 = vshrl.u32 %v143, 7
    %s145 = smul.u32 0, 8
    %v146 = vstv %s145
    %v147 = vadd.s32 %v144, %v146
    %vm148 = vcmp.gt.s32.totalorder %v142, %v147
    %v149 = vmax.f32 %v140, 0.0
    %v150 = vsel %vm148, %v149, 0.0
    %151 = vadd.xlane.f32.xlu0 %v150
    %v152 = vpop.xlane.xlu0 %151
    %v153 = vrot.slane %v152, 4
    %v154 = vadd.f32 %v152, %v153
    %v155 = vrot.slane %v154, 2
    %v156 = vadd.f32 %v154, %v155
    %v157 = vrot.slane %v156, 1
    %v158 = vadd.f32 %v156, %v157
    %s159 = vtos %v158
    %v160 = vstv %s159
    %v161 = vld [vmem:[#allocation6] sm:$0x1]
    %v162 = vadd.f32 %v161, %v160
    %vm163 = vcmask 0
    %164 = vst.msk [vmem:[#allocation6] sm:$0x1] %vm163, %v162
    // Predicated region
    $region22: #{tpu_custom_call.1} parent=1 // pred_check
      _
    $region23: #{tpu_custom_call.1} parent=1 // pred_check_branch
      %166 = sbr.rel (0) target = $region25
    $region24: #{tpu_custom_call.1} parent=1 // pred_region
      %s168 = ssub.s32 16, 16
      %169 = vsyncadd [#allocation5], %s168
      %s171 = sshll.u32 [#allocation6], 4
      %s172 = int_to_ptr.vmem [resolvable:$true] %s171
      %174 = dma.vmem_to_hbm [thread:$0]  %s172, 16, %s3, [#allocation5]
    $region25: #{tpu_custom_call.1} parent=1 // pred_fallthru
      _
    // Predicated region
    $region26: #{tpu_custom_call.1} parent=1 // pred_check
      _
    $region27: #{tpu_custom_call.1} parent=1 // pred_check_branch
      %176 = sbr.rel (0) target = $region29
    $region28: #{tpu_custom_call.1} parent=1 // pred_region
      %177 = dma.done [#allocation5], 16
    $region29: #{tpu_custom_call.1} parent=1 // pred_fallthru
      _
    %178 = vsyncpa [#allocation4], 1
    %179 = vsyncpa [#allocation5], 1

</llo_original>
